<compile_context>
chip_gen: v7x
topology: tpu7x:2x2x1
jax: 0.10.0
libtpu: 0.0.40
codegen_flags: <defaults>
</compile_context>

<pallas_src>
import functools

import jax
import jax.numpy as jnp
import numpy as np
from jax.experimental import pallas as pl
from jax.experimental.pallas import tpu as pltpu


def _round_up(n, m):
    return ((n + m - 1) // m) * m


def backbone_kernel(x_ref, w_stem_ref, gamma_ref, beta_ref, w_cls_ref,
                    cls_ref, gfeat_ref, acc_ref, *, hw_total, eps):
    """One grid step over spatial tiles: accumulate pool; finalize on last step.

    x_ref:      [B, C, THW]  bf16 spatial tile of the NCHW input (no transpose)
    w_stem_ref: [C, P]       bf16 stand-in base (1x1-conv weight)
    gamma_ref:  [1, P]       f32 BN weight
    beta_ref:   [1, P]       f32 BN bias (frozen at 0 in the PyTorch module)
    w_cls_ref:  [P, NCpad]   bf16 classifier weight, zero-padded to lane-dense NC
    cls_ref:    [B, NCpad]   f32 out: cls_score (padding sliced off in wrapper)
    gfeat_ref:  [B, P]       f32 out: global_feat (pre-BN, as PyTorch returns)
    acc_ref:    [B, C]       f32 scratch: running spatial sum of x
    """
    k = pl.program_id(0)

    @pl.when(k == 0)
    def _init():
        acc_ref[...] = jnp.zeros_like(acc_ref)

    # Streamed global average pool: per-(sample, channel) sum over this spatial
    # tile (lane reduction), accumulated in f32.
    acc_ref[...] += jnp.sum(x_ref[...].astype(jnp.float32), axis=-1)

    @pl.when(k == pl.num_programs(0) - 1)
    def _finalize():
        pooled = acc_ref[...] * (1.0 / hw_total)                  # [B, C] f32

        # Linear 1x1 stem stand-in applied AFTER the pool (mean(xW) == mean(x)W).
        # K == C is tiny, so this matmul is negligible post-pooling; keep f32.
        gf = jnp.dot(pooled, w_stem_ref[...].astype(jnp.float32),
                     preferred_element_type=jnp.float32)          # [B, P]
        gfeat_ref[...] = gf

        # bnneck: BatchNorm1d, training-mode biased batch statistics (f32).
        mu = jnp.mean(gf, axis=0, keepdims=True)
        var = jnp.mean((gf - mu) ** 2, axis=0, keepdims=True)
        scale = gamma_ref[...] * jax.lax.rsqrt(var + eps)         # folded scale
        feat = (gf - mu) * scale + beta_ref[...]

        # Classifier: Linear(in_planes, num_classes, bias=False) on the MXU.
        # bf16 operands, f32 accumulation, lane-dense (padded) output store.
        cls_ref[...] = jnp.dot(feat.astype(jnp.bfloat16), w_cls_ref[...],
                               preferred_element_type=jnp.float32)


def backbone_forward(x_nchw, params, eps=1e-5):
    """Wrapper: free NCHW->[B,C,HW] reshape, then one gridded pallas_call."""
    B, C, H, W = x_nchw.shape
    HW = H * W

    # Free reshape (contiguous merge of trailing dims) -- no transpose pass.
    x3 = x_nchw.astype(jnp.bfloat16).reshape(B, C, HW)
    w_stem = params["w_stem"].astype(jnp.bfloat16)          # [C, P]
    gamma = params["bn_gamma"].astype(jnp.float32)          # [1, P]
    beta = params["bn_beta"].astype(jnp.float32)            # [1, P]
    w_cls = params["w_cls"].astype(jnp.bfloat16)            # [P, NC]
    P = w_stem.shape[1]
    nc = w_cls.shape[1]

    # Lane-dense classifier output: pad NC up to a multiple of 128.
    nc_pad = _round_up(nc, 128)
    if nc_pad != nc:
        w_cls = jnp.pad(w_cls, ((0, 0), (0, nc_pad - nc)))

    # Spatial tile: largest of (512, 256, 128) that divides HW, else full extent.
    thw = HW
    for cand in (512, 256, 128):
        if HW % cand == 0:
            thw = cand
            break
    grid = (HW // thw,)

    kern = functools.partial(backbone_kernel, hw_total=HW, eps=eps)
    cls_pad, global_feat = pl.pallas_call(
        kern,
        out_shape=(jax.ShapeDtypeStruct((B, nc_pad), jnp.float32),
                   jax.ShapeDtypeStruct((B, P), jnp.float32)),
        grid_spec=pltpu.PrefetchScalarGridSpec(
            num_scalar_prefetch=0,
            grid=grid,
            in_specs=[
                pl.BlockSpec((B, C, thw), lambda k: (0, 0, k)),   # streamed x tiles
                pl.BlockSpec((C, P), lambda k: (0, 0)),           # resident weights
                pl.BlockSpec((1, P), lambda k: (0, 0)),
                pl.BlockSpec((1, P), lambda k: (0, 0)),
                pl.BlockSpec((P, nc_pad), lambda k: (0, 0)),
            ],
            out_specs=(
                pl.BlockSpec((B, nc_pad), lambda k: (0, 0)),
                pl.BlockSpec((B, P), lambda k: (0, 0)),
            ),
            scratch_shapes=[pltpu.VMEM((B, C), jnp.float32)],
        ),
        compiler_params=pltpu.CompilerParams(
            # Spatial axis is a reduction; BN couples the batch so no parallel axis.
            dimension_semantics=("arbitrary",),
            vmem_limit_bytes=32 * 1024 * 1024),
    )(x3, w_stem, gamma, beta, w_cls)

    return cls_pad[:, :nc], global_feat


def reference_forward(x_nchw, params, eps=1e-5):
    """Pure-JAX reference mirroring the PyTorch training-mode forward
    (with the same bf16 casts the kernel applies)."""
    f32 = jnp.float32
    xb = x_nchw.astype(jnp.bfloat16).astype(f32)
    ws = params["w_stem"].astype(jnp.bfloat16).astype(f32)
    wc = params["w_cls"].astype(jnp.bfloat16).astype(f32)

    pooled = jnp.mean(xb, axis=(2, 3))                            # [B, C]
    gf = pooled @ ws                                              # [B, P]
    mu = jnp.mean(gf, axis=0, keepdims=True)
    var = jnp.mean((gf - mu) ** 2, axis=0, keepdims=True)
    feat = (gf - mu) * jax.lax.rsqrt(var + eps) * params["bn_gamma"] \
        + params["bn_beta"]
    cls = feat.astype(jnp.bfloat16).astype(f32) @ wc
    return cls, gf


def init_params(key, C, P, num_classes):
    k_stem, k_cls = jax.random.split(key)
    # conv stem: kaiming normal, mode='fan_in' -> std = sqrt(2 / fan_in)
    w_stem = jax.random.normal(k_stem, (C, P), jnp.float32) * np.sqrt(2.0 / C)
    # BatchNorm1d bottleneck: weight=1, bias=0 (weights_init_kaiming), bias frozen
    bn_gamma = jnp.ones((1, P), jnp.float32)
    bn_beta = jnp.zeros((1, P), jnp.float32)
    # classifier: normal std=0.001, no bias (weights_init_classifier)
    w_cls = jax.random.normal(k_cls, (P, num_classes), jnp.float32) * 0.001
    return {"w_stem": w_stem, "bn_gamma": bn_gamma, "bn_beta": bn_beta,
            "w_cls": w_cls}


if __name__ == "__main__":
    # Small image-like NCHW input; 32x32 spatial so the streamed-pool grid runs
    # more than one step (HW=1024 -> two 512-wide spatial tiles).
    B, C, H, W = 2, 4, 32, 32
    P = 128                           # stand-in for self.in_planes (2048 in ResNet50)
    NUM_CLASSES = 8

    key = jax.random.PRNGKey(0)
    k_x, k_p = jax.random.split(key)
    x = jax.random.normal(k_x, (B, C, H, W), jnp.float32)
    params = init_params(k_p, C, P, NUM_CLASSES)

    cls_score, global_feat = backbone_forward(x, params)
    cls_score = jax.block_until_ready(cls_score)
    global_feat = jax.block_until_ready(global_feat)

    ref_cls, ref_gf = reference_forward(x, params)
    np.testing.assert_allclose(np.asarray(global_feat), np.asarray(ref_gf),
                               rtol=5e-3, atol=1e-4)
    np.testing.assert_allclose(np.asarray(cls_score), np.asarray(ref_cls),
                               rtol=5e-3, atol=1e-4)

    print("KERNEL_OK")
</pallas_src>

<mosaic_0001>
module attributes {stable_mosaic.version = 11 : i64} {
  func.func @backbone_kernel(%arg0: i32, %arg1: memref<2x4x512xbf16, #tpu.memory_space<vmem>>, %arg2: memref<4x128xbf16, #tpu.memory_space<vmem>>, %arg3: memref<1x128xf32, #tpu.memory_space<vmem>>, %arg4: memref<1x128xf32, #tpu.memory_space<vmem>>, %arg5: memref<128x128xbf16, #tpu.memory_space<vmem>>, %arg6: memref<2x128xf32, #tpu.memory_space<vmem>>, %arg7: memref<2x128xf32, #tpu.memory_space<vmem>>, %arg8: memref<2x4xf32, #tpu.memory_space<vmem>>) attributes {dimension_semantics = [#tpu.dimension_semantics<arbitrary>], iteration_bounds = array<i64: 2>, scalar_prefetch = 0 : i64, scratch_operands = 1 : i64, tpu.core_type = #tpu.core_type<tc>, window_params = [{transform_indices = @transform_0, window_bounds = array<i64: 2, 4, 512>}, {pipeline_mode = #tpu.pipeline_mode<synchronous>, transform_indices = @transform_1, window_bounds = array<i64: 4, 128>}, {pipeline_mode = #tpu.pipeline_mode<synchronous>, transform_indices = @transform_2, window_bounds = array<i64: 1, 128>}, {pipeline_mode = #tpu.pipeline_mode<synchronous>, transform_indices = @transform_3, window_bounds = array<i64: 1, 128>}, {pipeline_mode = #tpu.pipeline_mode<synchronous>, transform_indices = @transform_4, window_bounds = array<i64: 128, 128>}, {pipeline_mode = #tpu.pipeline_mode<synchronous>, transform_indices = @transform_5, window_bounds = array<i64: 2, 128>}, {pipeline_mode = #tpu.pipeline_mode<synchronous>, transform_indices = @transform_6, window_bounds = array<i64: 2, 128>}]} {
    %c0_i32 = arith.constant 0 : i32
    %0 = arith.cmpi eq, %arg0, %c0_i32 : i32
    %1 = arith.extui %0 : i1 to i32
    %c0_i32_0 = arith.constant 0 : i32
    %2 = arith.cmpi ne, %1, %c0_i32_0 : i32
    scf.if %2 {
      %cst_8 = arith.constant 0.000000e+00 : f32
      %12 = vector.broadcast %cst_8 : f32 to vector<2x4xf32>
      %c0_9 = arith.constant 0 : index
      %c0_10 = arith.constant 0 : index
      %13 = vector.load %arg8[%c0_9, %c0_10] : memref<2x4xf32, #tpu.memory_space<vmem>>, vector<2x4xf32>
      tpu.vector_store %arg8[%c0_9, %c0_10], %12 {strides = array<i32>} : memref<2x4xf32, #tpu.memory_space<vmem>>, vector<2x4xf32>,
    } else {
    }
    %c0 = arith.constant 0 : index
    %c0_1 = arith.constant 0 : index
    %3 = vector.load %arg8[%c0, %c0_1] : memref<2x4xf32, #tpu.memory_space<vmem>>, vector<2x4xf32>
    %c0_2 = arith.constant 0 : index
    %c0_3 = arith.constant 0 : index
    %c0_4 = arith.constant 0 : index
    %4 = vector.load %arg1[%c0_2, %c0_3, %c0_4] : memref<2x4x512xbf16, #tpu.memory_space<vmem>>, vector<2x4x512xbf16>
    %5 = arith.extf %4 : vector<2x4x512xbf16> to vector<2x4x512xf32>
    %cst = arith.constant dense<0.000000e+00> : vector<2x4xf32>
    %6 = vector.multi_reduction <add>, %5, %cst [2] : vector<2x4x512xf32> to vector<2x4xf32>
    %7 = arith.addf %3, %6 : vector<2x4xf32>
    %c0_5 = arith.constant 0 : index
    %c0_6 = arith.constant 0 : index
    %8 = vector.load %arg8[%c0_5, %c0_6] : memref<2x4xf32, #tpu.memory_space<vmem>>, vector<2x4xf32>
    tpu.vector_store %arg8[%c0_5, %c0_6], %7 {strides = array<i32>} : memref<2x4xf32, #tpu.memory_space<vmem>>, vector<2x4xf32>,
    %c1_i32 = arith.constant 1 : i32
    %9 = arith.cmpi eq, %arg0, %c1_i32 : i32
    %10 = arith.extui %9 : i1 to i32
    %c0_i32_7 = arith.constant 0 : i32
    %11 = arith.cmpi ne, %10, %c0_i32_7 : i32
    scf.if %11 {
      %c0_8 = arith.constant 0 : index
      %c0_9 = arith.constant 0 : index
      %12 = vector.load %arg8[%c0_8, %c0_9] : memref<2x4xf32, #tpu.memory_space<vmem>>, vector<2x4xf32>
      %cst_10 = arith.constant 9.765625E-4 : f32
      %13 = vector.broadcast %cst_10 : f32 to vector<2x4xf32>
      %14 = arith.mulf %12, %13 : vector<2x4xf32>
      %c0_11 = arith.constant 0 : index
      %c0_12 = arith.constant 0 : index
      %15 = vector.load %arg2[%c0_11, %c0_12] : memref<4x128xbf16, #tpu.memory_space<vmem>>, vector<4x128xbf16>
      %16 = arith.extf %15 : vector<4x128xbf16> to vector<4x128xf32>
      %cst_13 = arith.constant dense<0.000000e+00> : vector<2x128xf32>
      %17 = tpu.matmul %14, %16, %cst_13 {dimension_numbers = #tpu.dot_dimension_numbers<[1], [0], [0], [1], [0, 0, 1, 1], [], []>} : vector<2x4xf32>, vector<4x128xf32>, vector<2x128xf32> -> vector<2x128xf32>
      %c0_14 = arith.constant 0 : index
      %c0_15 = arith.constant 0 : index
      %18 = vector.load %arg7[%c0_14, %c0_15] : memref<2x128xf32, #tpu.memory_space<vmem>>, vector<2x128xf32>
      tpu.vector_store %arg7[%c0_14, %c0_15], %17 {strides = array<i32>} : memref<2x128xf32, #tpu.memory_space<vmem>>, vector<2x128xf32>,
      %cst_16 = arith.constant dense<0.000000e+00> : vector<128xf32>
      %19 = vector.multi_reduction <add>, %17, %cst_16 [0] : vector<2x128xf32> to vector<128xf32>
      %20 = vector.shape_cast %19 : vector<128xf32> to vector<1x128xf32>
      %cst_17 = arith.constant 2.000000e+00 : f32
      %21 = vector.broadcast %cst_17 : f32 to vector<1x128xf32>
      %22 = arith.divf %20, %21 : vector<1x128xf32>
      %23 = vector.broadcast %22 : vector<1x128xf32> to vector<2x128xf32>
      %24 = arith.subf %17, %23 : vector<2x128xf32>
      %25 = arith.mulf %24, %24 : vector<2x128xf32>
      %cst_18 = arith.constant dense<0.000000e+00> : vector<128xf32>
      %26 = vector.multi_reduction <add>, %25, %cst_18 [0] : vector<2x128xf32> to vector<128xf32>
      %27 = vector.shape_cast %26 : vector<128xf32> to vector<1x128xf32>
      %cst_19 = arith.constant 2.000000e+00 : f32
      %28 = vector.broadcast %cst_19 : f32 to vector<1x128xf32>
      %29 = arith.divf %27, %28 : vector<1x128xf32>
      %c0_20 = arith.constant 0 : index
      %c0_21 = arith.constant 0 : index
      %30 = vector.load %arg3[%c0_20, %c0_21] : memref<1x128xf32, #tpu.memory_space<vmem>>, vector<1x128xf32>
      %cst_22 = arith.constant 9.99999974E-6 : f32
      %31 = vector.broadcast %cst_22 : f32 to vector<1x128xf32>
      %32 = arith.addf %29, %31 : vector<1x128xf32>
      %33 = math.rsqrt %32 : vector<1x128xf32>
      %34 = arith.mulf %30, %33 : vector<1x128xf32>
      %35 = vector.broadcast %22 : vector<1x128xf32> to vector<2x128xf32>
      %36 = arith.subf %17, %35 : vector<2x128xf32>
      %37 = vector.broadcast %34 : vector<1x128xf32> to vector<2x128xf32>
      %38 = arith.mulf %36, %37 : vector<2x128xf32>
      %c0_23 = arith.constant 0 : index
      %c0_24 = arith.constant 0 : index
      %39 = vector.load %arg4[%c0_23, %c0_24] : memref<1x128xf32, #tpu.memory_space<vmem>>, vector<1x128xf32>
      %40 = vector.broadcast %39 : vector<1x128xf32> to vector<2x128xf32>
      %41 = arith.addf %38, %40 : vector<2x128xf32>
      %42 = arith.truncf %41 : vector<2x128xf32> to vector<2x128xbf16>
      %c0_25 = arith.constant 0 : index
      %c0_26 = arith.constant 0 : index
      %43 = vector.load %arg5[%c0_25, %c0_26] : memref<128x128xbf16, #tpu.memory_space<vmem>>, vector<128x128xbf16>
      %cst_27 = arith.constant dense<0.000000e+00> : vector<2x128xf32>
      %44 = tpu.matmul %42, %43, %cst_27 {dimension_numbers = #tpu.dot_dimension_numbers<[1], [0], [0], [1], [0, 0, 1, 1], [], []>} : vector<2x128xbf16>, vector<128x128xbf16>, vector<2x128xf32> -> vector<2x128xf32>
      %c0_28 = arith.constant 0 : index
      %c0_29 = arith.constant 0 : index
      %45 = vector.load %arg6[%c0_28, %c0_29] : memref<2x128xf32, #tpu.memory_space<vmem>>, vector<2x128xf32>
      tpu.vector_store %arg6[%c0_28, %c0_29], %44 {strides = array<i32>} : memref<2x128xf32, #tpu.memory_space<vmem>>, vector<2x128xf32>,
    } else {
    }
    return
  }
  func.func @transform_0(%arg0: i32) -> (i32, i32, i32) {
    %c0_i32 = arith.constant 0 : i32
    %c0_i32_0 = arith.constant 0 : i32
    %c0_i32_1 = arith.constant 0 : i32
    return %c0_i32, %c0_i32_0, %arg0 : i32, i32, i32
  }
  func.func @transform_1(%arg0: i32) -> (i32, i32) {
    %c0_i32 = arith.constant 0 : i32
    %c0_i32_0 = arith.constant 0 : i32
    %c0_i32_1 = arith.constant 0 : i32
    return %c0_i32, %c0_i32_0 : i32, i32
  }
  func.func @transform_2(%arg0: i32) -> (i32, i32) {
    %c0_i32 = arith.constant 0 : i32
    %c0_i32_0 = arith.constant 0 : i32
    %c0_i32_1 = arith.constant 0 : i32
    return %c0_i32, %c0_i32_0 : i32, i32
  }
  func.func @transform_3(%arg0: i32) -> (i32, i32) {
    %c0_i32 = arith.constant 0 : i32
    %c0_i32_0 = arith.constant 0 : i32
    %c0_i32_1 = arith.constant 0 : i32
    return %c0_i32, %c0_i32_0 : i32, i32
  }
  func.func @transform_4(%arg0: i32) -> (i32, i32) {
    %c0_i32 = arith.constant 0 : i32
    %c0_i32_0 = arith.constant 0 : i32
    %c0_i32_1 = arith.constant 0 : i32
    return %c0_i32, %c0_i32_0 : i32, i32
  }
  func.func @transform_5(%arg0: i32) -> (i32, i32) {
    %c0_i32 = arith.constant 0 : i32
    %c0_i32_0 = arith.constant 0 : i32
    %c0_i32_1 = arith.constant 0 : i32
    return %c0_i32, %c0_i32_0 : i32, i32
  }
  func.func @transform_6(%arg0: i32) -> (i32, i32) {
    %c0_i32 = arith.constant 0 : i32
    %c0_i32_0 = arith.constant 0 : i32
    %c0_i32_1 = arith.constant 0 : i32
    return %c0_i32, %c0_i32_0 : i32, i32
  }
}

</mosaic_0001>

<llo_original>
// kernel: tpu_custom_call.1
$region0: #{tpu_custom_call.1}
  #allocation0 [shape = 'u32[]', space=smem, size = 0x4, offset = 0x4, fixed_abs, tag = 'smem constant byte address 0x4 - core index']
  #allocation1 [shape = 'u32[144,128]{1,0:T(1,128)}', space=vmem, size = 0x12000, scoped, tag = 'internal scratch']
  #allocation2 [shape = 'f32[2,4]{1,0:T(2,128)}', space=vmem, size = 0x400, scoped, tag = 'scratch operand']
  %s0 = inlined_call_operand.hbm [shape: bf16[2,4,1024], index: 0, kind: input, shape index: {}]
  %s1 = inlined_call_operand.vmem [shape: bf16[4,128], index: 1, kind: input, shape index: {}]
  %s2 = inlined_call_operand.vmem [shape: f32[1,128], index: 2, kind: input, shape index: {}]
  %s3 = inlined_call_operand.vmem [shape: f32[1,128], index: 3, kind: input, shape index: {}]
  %s4 = inlined_call_operand.hbm [shape: bf16[128,128], index: 4, kind: input, shape index: {}]
  %s5 = inlined_call_operand.hbm [shape: f32[2,128], index: 5, kind: output, shape index: {0}]
  %s6 = inlined_call_operand.hbm [shape: f32[2,128], index: 6, kind: output, shape index: {1}]
  %7 = xla_tuple %s5, %s6
  %s8 = sld [smem:[#allocation0]]
  $region77: #{tpu_custom_call.1} parent=0
    _
  %s10 = ssub.s32 1, %s8
  %s11 = scalar_select 0, %s10, %s8
  $region1: #{tpu_custom_call.1} parent=0
    #allocation3 [shape = 'u8[16384]{0}', space=vmem, size = 0x4000, scoped, tag = 'input window, operand 0']
    #allocation4 [shape = 's32[2]{0}', space=sflag, size = 0x8, scoped, tag = 'scoped memory for tpu_custom_call.1']
    #allocation5 [shape = 's32[2]{0}', space=sflag, size = 0x8, scoped, tag = 'scoped memory for tpu_custom_call.1']
    #allocation6 [shape = 'u8[32768]{0}', space=vmem, size = 0x8000, scoped, tag = 'input window, operand 4, single buffered']
    #allocation7 [shape = 's32[1]{0}', space=sflag, size = 0x4, scoped, tag = 'scoped memory for tpu_custom_call.1']
    #allocation8 [shape = 'u8[1024]{0}', space=vmem, size = 0x400, scoped, tag = 'output window, operand 0, single buffered']
    #allocation9 [shape = 'u8[1024]{0}', space=vmem, size = 0x400, scoped, tag = 'output window, operand 1, single buffered']
    #allocation10 [shape = 's32[1]{0}', space=sflag, size = 0x4, scoped, tag = 'scoped memory for tpu_custom_call.1']
    %12 = vsyncpa [#allocation4], 0
    %s13 = scalar_lea.sflag [#allocation4], 1
    %14 = vsyncpa %s13, 0
    %15 = vsyncpa [#allocation7], 0
    %16 = vsyncpa [#allocation5], 0
    %17 = vsyncpa [#allocation10], 0
    loop: start=0, step=1, limit=4
    $region2: #{tpu_custom_call.1} parent=1 // loop_pre_header
      _
    $region3: #{tpu_custom_call.1} parent=1 // loop_header
      %s19 = sphi 0, %s23
      %p20 = scmp.ge.s32.totalorder %s19, 4
      %s29 = sphi 0, %s31
      %s32 = sphi 0, %s29
      %s33 = sphi 0, %s32
      %s49 = sphi 0, %s33
      %s53 = sphi 0, %s53
      %s55 = sphi 0, %s53
      %s56 = sphi 0, %s55
      %s70 = sphi 0, %s56
      %s74 = sphi 0, %s74
      %s76 = sphi 0, %s74
      %s77 = sphi 0, %s76
      %s91 = sphi 0, %s77
      %s95 = sphi 0, %s95
      %s97 = sphi 0, %s95
      %s98 = sphi 0, %s97
      %s112 = sphi 0, %s98
      %s116 = sphi 0, %s116
      %s118 = sphi 0, %s116
      %s119 = sphi 0, %s118
      %s133 = sphi 0, %s119
      %s137 = sphi 0, %s137
      %s139 = sphi 0, %s137
      %s140 = sphi 0, %s139
      %s154 = sphi 0, %s140
      %s158 = sphi 0, %s158
      %s160 = sphi 0, %s158
      %s161 = sphi 0, %s160
      %s175 = sphi 0, %s161
    $region4: #{tpu_custom_call.1} parent=1 // loop_header_branch
      %22 = sbr.rel (%p20) target = $region8
    $region5: #{tpu_custom_call.1} parent=1 // loop_body
      %s24 = ssub.s32 %s19, 1
      %s25 = ssub.s32 %s19, 2
      %s26 = sadd.s32 %s19, 1
      %s27 = ssub.s32 %s19, %s26
      %p28 = scmp.eq.s32.totalorder %s27, 0
      %s30 = sadd.s32 %s29, 1
      %s31 = scalar_select %p28, %s29, %s30
      %p34 = pneg %p28
      %p35 = scmp.eq.s32.totalorder %s19, 1
      %p36 = por %p34, %p35
      %p37 = scmp.ne.s32.totalorder %s29, %s32
      %p38 = scmp.eq.s32.totalorder %s19, 0
      %p39 = por %p37, %p38
      %p40 = scmp.ne.s32.totalorder %s29, %s32
      %p41 = scmp.eq.s32.totalorder %s24, 1
      %p42 = por %p40, %p41
      %p43 = scmp.ne.s32.totalorder %s32, %s33
      %p44 = scmp.eq.s32.totalorder %s24, 0
      %p45 = por %p43, %p44
      %p46 = scmp.ne.s32.totalorder %s32, %s33
      %p47 = scmp.eq.s32.totalorder %s25, 1
      %p48 = por %p46, %p47
      %p50 = scmp.ne.s32.totalorder %s33, %s49
      %p51 = scmp.eq.s32.totalorder %s25, 0
      %p52 = por %p50, %p51
      %s54 = sadd.s32 %s53, 1
      %p57 = scmp.eq.s32.totalorder %s19, 1
      %p58 = scmp.ne.s32.totalorder %s53, %s55
      %p59 = scmp.eq.s32.totalorder %s19, 0
      %p60 = por %p58, %p59
      %p61 = scmp.ne.s32.totalorder %s53, %s55
      %p62 = scmp.eq.s32.totalorder %s24, 1
      %p63 = por %p61, %p62
      %p64 = scmp.ne.s32.totalorder %s55, %s56
      %p65 = scmp.eq.s32.totalorder %s24, 0
      %p66 = por %p64, %p65
      %p67 = scmp.ne.s32.totalorder %s55, %s56
      %p68 = scmp.eq.s32.totalorder %s25, 1
      %p69 = por %p67, %p68
      %p71 = scmp.ne.s32.totalorder %s56, %s70
      %p72 = scmp.eq.s32.totalorder %s25, 0
      %p73 = por %p71, %p72
      %s75 = sadd.s32 %s74, 1
      %p78 = scmp.eq.s32.totalorder %s19, 1
      %p79 = scmp.ne.s32.totalorder %s74, %s76
      %p80 = scmp.eq.s32.totalorder %s19, 0
      %p81 = por %p79, %p80
      %p82 = scmp.ne.s32.totalorder %s74, %s76
      %p83 = scmp.eq.s32.totalorder %s24, 1
      %p84 = por %p82, %p83
      %p85 = scmp.ne.s32.totalorder %s76, %s77
      %p86 = scmp.eq.s32.totalorder %s24, 0
      %p87 = por %p85, %p86
      %p88 = scmp.ne.s32.totalorder %s76, %s77
      %p89 = scmp.eq.s32.totalorder %s25, 1
      %p90 = por %p88, %p89
      %p92 = scmp.ne.s32.totalorder %s77, %s91
      %p93 = scmp.eq.s32.totalorder %s25, 0
      %p94 = por %p92, %p93
      %s96 = sadd.s32 %s95, 1
      %p99 = scmp.eq.s32.totalorder %s19, 1
      %p100 = scmp.ne.s32.totalorder %s95, %s97
      %p101 = scmp.eq.s32.totalorder %s19, 0
      %p102 = por %p100, %p101
      %p103 = scmp.ne.s32.totalorder %s95, %s97
      %p104 = scmp.eq.s32.totalorder %s24, 1
      %p105 = por %p103, %p104
      %p106 = scmp.ne.s32.totalorder %s97, %s98
      %p107 = scmp.eq.s32.totalorder %s24, 0
      %p108 = por %p106, %p107
      %p109 = scmp.ne.s32.totalorder %s97, %s98
      %p110 = scmp.eq.s32.totalorder %s25, 1
      %p111 = por %p109, %p110
      %p113 = scmp.ne.s32.totalorder %s98, %s112
      %p114 = scmp.eq.s32.totalorder %s25, 0
      %p115 = por %p113, %p114
      %s117 = sadd.s32 %s116, 1
      %p120 = scmp.eq.s32.totalorder %s19, 1
      %p121 = scmp.ne.s32.totalorder %s116, %s118
      %p122 = scmp.eq.s32.totalorder %s19, 0
      %p123 = por %p121, %p122
      %p124 = scmp.ne.s32.totalorder %s116, %s118
      %p125 = scmp.eq.s32.totalorder %s24, 1
      %p126 = por %p124, %p125
      %p127 = scmp.ne.s32.totalorder %s118, %s119
      %p128 = scmp.eq.s32.totalorder %s24, 0
      %p129 = por %p127, %p128
      %p130 = scmp.ne.s32.totalorder %s118, %s119
      %p131 = scmp.eq.s32.totalorder %s25, 1
      %p132 = por %p130, %p131
      %p134 = scmp.ne.s32.totalorder %s119, %s133
      %p135 = scmp.eq.s32.totalorder %s25, 0
      %p136 = por %p134, %p135
      %s138 = sadd.s32 %s137, 1
      %p141 = scmp.eq.s32.totalorder %s19, 1
      %p142 = scmp.ne.s32.totalorder %s137, %s139
      %p143 = scmp.eq.s32.totalorder %s19, 0
      %p144 = por %p142, %p143
      %p145 = scmp.ne.s32.totalorder %s137, %s139
      %p146 = scmp.eq.s32.totalorder %s24, 1
      %p147 = por %p145, %p146
      %p148 = scmp.ne.s32.totalorder %s139, %s140
      %p149 = scmp.eq.s32.totalorder %s24, 0
      %p150 = por %p148, %p149
      %p151 = scmp.ne.s32.totalorder %s139, %s140
      %p152 = scmp.eq.s32.totalorder %s25, 1
      %p153 = por %p151, %p152
      %p155 = scmp.ne.s32.totalorder %s140, %s154
      %p156 = scmp.eq.s32.totalorder %s25, 0
      %p157 = por %p155, %p156
      %s159 = sadd.s32 %s158, 1
      %p162 = scmp.eq.s32.totalorder %s19, 1
      %p163 = scmp.ne.s32.totalorder %s158, %s160
      %p164 = scmp.eq.s32.totalorder %s19, 0
      %p165 = por %p163, %p164
      %p166 = scmp.ne.s32.totalorder %s158, %s160
      %p167 = scmp.eq.s32.totalorder %s24, 1
      %p168 = por %p166, %p167
      %p169 = scmp.ne.s32.totalorder %s160, %s161
      %p170 = scmp.eq.s32.totalorder %s24, 0
      %p171 = por %p169, %p170
      %p172 = scmp.ne.s32.totalorder %s160, %s161
      %p173 = scmp.eq.s32.totalorder %s25, 1
      %p174 = por %p172, %p173
      %p176 = scmp.ne.s32.totalorder %s161, %s175
      %p177 = scmp.eq.s32.totalorder %s25, 0
      %p178 = por %p176, %p177
      %p179 = scmp.le.s32.totalorder 1, %s19
      %p180 = scmp.lt.s32.totalorder %s19, 3
      %p181 = pnand %p179, %p180
      %p182 = pneg %p181
      // Predicated region
      $region9: #{tpu_custom_call.1} parent=5 // pred_check
        _
      $region10: #{tpu_custom_call.1} parent=5 // pred_check_branch
        %184 = sbr.rel (%p181) target = $region12
      $region11: #{tpu_custom_call.1} parent=5 // pred_region
        %s185 = ssub.s32 %s19, 1
        // Predicated region
        $region13: #{tpu_custom_call.1} parent=11 // pred_check
          %p186 = pneg %p66
        $region14: #{tpu_custom_call.1} parent=11 // pred_check_branch
          %188 = sbr.rel (%p186) target = $region16
        $region15: #{tpu_custom_call.1} parent=11 // pred_region
          _
        $region16: #{tpu_custom_call.1} parent=11 // pred_fallthru
          _
        // Predicated region
        $region17: #{tpu_custom_call.1} parent=11 // pred_check
          %p189 = pneg %p87
        $region18: #{tpu_custom_call.1} parent=11 // pred_check_branch
          %191 = sbr.rel (%p189) target = $region20
        $region19: #{tpu_custom_call.1} parent=11 // pred_region
          _
        $region20: #{tpu_custom_call.1} parent=11 // pred_fallthru
          _
        // Predicated region
        $region21: #{tpu_custom_call.1} parent=11 // pred_check
          %p192 = pneg %p108
        $region22: #{tpu_custom_call.1} parent=11 // pred_check_branch
          %194 = sbr.rel (%p192) target = $region24
        $region23: #{tpu_custom_call.1} parent=11 // pred_region
          _
        $region24: #{tpu_custom_call.1} parent=11 // pred_fallthru
          _
        // Predicated region
        $region25: #{tpu_custom_call.1} parent=11 // pred_check
          %p195 = pneg %p129
        $region26: #{tpu_custom_call.1} parent=11 // pred_check_branch
          %197 = sbr.rel (%p195) target = $region28
        $region27: #{tpu_custom_call.1} parent=11 // pred_region
          %s199 = ssub.s32 1024, 1024
          %200 = vsyncadd [#allocation7], %s199
          %s201 = sshll.u32 [#allocation6], 4
          %s202 = int_to_ptr.vmem [resolvable:$true] %s201
          %207 = dma.hbm_to_vmem [thread:$0]  %s4, 1024, %s202, [#allocation7], 64, 64, 4
        $region28: #{tpu_custom_call.1} parent=11 // pred_fallthru
          _
      $region12: #{tpu_custom_call.1} parent=5 // pred_fallthru
        _
      %p208 = scmp.lt.s32.totalorder %s19, 2
      // Predicated region
      $region29: #{tpu_custom_call.1} parent=5 // pred_check
        %p209 = pneg %p208
      $region30: #{tpu_custom_call.1} parent=5 // pred_check_branch
        %211 = sbr.rel (%p209) target = $region32
      $region31: #{tpu_custom_call.1} parent=5 // pred_region
        // Predicated region
        $region33: #{tpu_custom_call.1} parent=31 // pred_check
          %p212 = pneg %p39
        $region34: #{tpu_custom_call.1} parent=31 // pred_check_branch
          %214 = sbr.rel (%p212) target = $region36
        $region35: #{tpu_custom_call.1} parent=31 // pred_region
          %s215 = sand.u32 %s29, 1
          %s216 = scalar_lea.sflag [#allocation4], %s215
          %s217 = sand.u32 %s29, 1
          %s218 = smul.addr %s217, 16
          %s219 = scalar_lea.vmem [#allocation3], %s218
          %s220 = smul.u32 4, %s19
          %s222 = ssub.s32 256, 256
          %223 = vsyncadd %s216, %s222
          %s224 = smul.addr %s220, 32
          %s225 = scalar_lea.hbm %s0, %s224
          %s226 = sshll.u32 %s219, 4
          %s227 = int_to_ptr.vmem [resolvable:$true] %s226
          %232 = dma.hbm_to_vmem [thread:$0]  %s225, 256, %s227, %s216, 256, 128, 8
        $region36: #{tpu_custom_call.1} parent=31 // pred_fallthru
          _
      $region32: #{tpu_custom_call.1} parent=5 // pred_fallthru
        _
      %p233 = scmp.le.s32.totalorder 1, %s19
      %p234 = scmp.lt.s32.totalorder %s19, 3
      %p235 = pnand %p233, %p234
      %p236 = pneg %p235
      // Predicated region
      $region37: #{tpu_custom_call.1} parent=5 // pred_check
        _
      $region38: #{tpu_custom_call.1} parent=5 // pred_check_branch
        %238 = sbr.rel (%p235) target = $region40
      $region39: #{tpu_custom_call.1} parent=5 // pred_region
        %s239 = ssub.s32 %s19, 1
        %s240 = sand.u32 %s32, 1
        %s241 = scalar_lea.sflag [#allocation4], %s240
        %s242 = sand.u32 %s32, 1
        %s243 = smul.addr %s242, 16
        %s244 = scalar_lea.vmem [#allocation3], %s243
        // Predicated region
        $region41: #{tpu_custom_call.1} parent=39 // pred_check
          %p245 = pneg %p45
        $region42: #{tpu_custom_call.1} parent=39 // pred_check_branch
          %247 = sbr.rel (%p245) target = $region44
        $region43: #{tpu_custom_call.1} parent=39 // pred_region
          %248 = dma.done %s241, 256
        $region44: #{tpu_custom_call.1} parent=39 // pred_fallthru
          _
        // Predicated region
        $region45: #{tpu_custom_call.1} parent=39 // pred_check
          %p249 = pneg %p129
        $region46: #{tpu_custom_call.1} parent=39 // pred_check_branch
          %251 = sbr.rel (%p249) target = $region48
        $region47: #{tpu_custom_call.1} parent=39 // pred_region
          %252 = dma.done [#allocation7], 1024
        $region48: #{tpu_custom_call.1} parent=39 // pred_fallthru
          _
        %s253 = sand.u32 %s32, 1
        %s254 = scalar_lea.sflag [#allocation4], %s253
        %s255 = sand.u32 %s32, 1
        %s256 = smul.addr %s255, 16
        %s257 = scalar_lea.vmem [#allocation3], %s256
        %p258 = pneg %p45
        %p259 = pneg %p42
        %p260 = pneg %p66
        %p261 = pneg %p63
        %p262 = pneg %p87
        %p263 = pneg %p84
        %p264 = pneg %p108
        %p265 = pneg %p105
        %p266 = pneg %p129
        %p267 = pneg %p126
        %p268 = pneg %p150
        %p269 = pneg %p147
        %p270 = pneg %p171
        %p271 = pneg %p168
        %s272 = smul.u32 4, %s24
        %p274 = scmp.eq.s32.totalorder %s24, 0
        // Predicated region
        $region49: #{tpu_custom_call.1} parent=39 // pred_check
          %p275 = pneg %p274
        $region50: #{tpu_custom_call.1} parent=39 // pred_check_branch
          %277 = sbr.rel (%p275) target = $region52
        $region51: #{tpu_custom_call.1} parent=39 // pred_region
          %vm278 = vcmask 25600
          %279 = vst.msk [vmem:[#allocation2] sm:$0x3] %vm278, 0.0
        $region52: #{tpu_custom_call.1} parent=39 // pred_fallthru
          _
        %v280 = vld [vmem:[#allocation2] sm:$0x3]
        %v281 = vld [vmem:[%s244] sm:$0xff]
        %v282 = vld [vmem:[%s244 + $0x8] sm:$0xff]
        %v283 = vunpack.c.l.bf16 %v281
        %v284 = vunpack.c.h.bf16 %v281
        %v285 = vunpack.c.l.bf16 %v282
        %v286 = vunpack.c.h.bf16 %v282
        %v291 = vcombine.high %v283, %v283
        %v292 = vcombine.high %v284, %v284
        %v293 = vcombine.high %v285, %v285
        %v294 = vcombine.high %v286, %v286
        %vm299 = vcmask 1043456
        %v300 = vsel %vm299, %v283, 0.0
        %v301 = vsel %vm299, %v291, 0.0
        %v302 = vadd.f32 %v300, %v301
        %v303 = vsel %vm299, %v284, 0.0
        %v304 = vadd.f32 %v302, %v303
        %v305 = vsel %vm299, %v292, 0.0
        %v306 = vadd.f32 %v304, %v305
        %307 = vadd.xlane.f32.xlu0 %v306
        %v308 = vpop.xlane.xlu0 %307
        %v309 = vsel %vm299, %v285, 0.0
        %v310 = vsel %vm299, %v293, 0.0
        %v311 = vadd.f32 %v309, %v310
        %v312 = vsel %vm299, %v286, 0.0
        %v313 = vadd.f32 %v311, %v312
        %v314 = vsel %vm299, %v294, 0.0
        %v315 = vadd.f32 %v313, %v314
        %316 = vadd.xlane.f32.xlu0 %v315
        %v317 = vpop.xlane.xlu0 %316
        %v320 = vlaneseq
        %v321 = vand.u32 %v320, 127
        %v322 = vlaneseq
        %v323 = vshrl.u32 %v322, 7
        %v324 = vsub.s32 %v321, %v323
        %v325 = vrot.slane %v308, %v324
        %v326 = vlaneseq
        %v327 = vshrl.u32 %v326, 7
        %v328 = vsub.s32 %v321, %v327
        %v329 = vrot.slane %v317, %v328
        %vm330 = vcmask 1041409
        %v331 = vsel %vm330, %v329, %v325
        %v333 = vadd.f32 %v280, %v331
        %vm334 = vcmask 25600
        %335 = vst.msk [vmem:[#allocation2] sm:$0x3] %vm334, %v333
        %p336 = scmp.eq.s32.totalorder %s24, 1
        // Predicated region
        $region53: #{tpu_custom_call.1} parent=39 // pred_check
          %p337 = pneg %p336
        $region54: #{tpu_custom_call.1} parent=39 // pred_check_branch
          %339 = sbr.rel (%p337) target = $region56
        $region55: #{tpu_custom_call.1} parent=39 // pred_region
          %v340 = vld [vmem:[#allocation2] sm:$0x3]
          %v341 = vmul.f32 %v340, 0.0009765625
          %v342 = vld [vmem:[%s1] sm:$0x3]
          %v343 = vunpack.c.l.bf16 %v342
          %vm344 = vcmask 31744
          %v346 = vsel %vm344, %v341, 0
          %v349 = vsel %vm299, %v343, 0
          %351 = vmatprep.subr.mxu0 0.0
          %352 = vmatpush1.msra.mxu0 %v349
          %353 = vmatprep.subr.mxu0 0.0
          %354 = vmatpush1.msra.mxu0 0.0
          %355 = vmatprep.subr.mxu0 0.0
          %356 = vmatpush1.msra.mxu0 0.0
          %357 = vmatprep.subr.mxu0 0.0
          %358 = vmatpush1.msra.mxu0 0.0
          %359 = vmatprep.subr.mxu0 0.0
          %360 = vmatpush1.msra.mxu0 0.0
          %361 = vmatprep.subr.mxu0 0.0
          %362 = vmatpush1.msra.mxu0 0.0
          %363 = vmatprep.subr.mxu0 0.0
          %364 = vmatpush1.msra.mxu0 0.0
          %365 = vmatprep.subr.mxu0 0.0
          %366 = vmatpush1.msra.mxu0 0.0
          %367 = vmatprep.subr.mxu0 0.0
          %368 = vmatpush1.msra.mxu0 0.0
          %369 = vmatprep.subr.mxu0 0.0
          %370 = vmatpush1.msra.mxu0 0.0
          %371 = vmatprep.subr.mxu0 0.0
          %372 = vmatpush1.msra.mxu0 0.0
          %373 = vmatprep.subr.mxu0 0.0
          %374 = vmatpush1.msra.mxu0 0.0
          %375 = vmatprep.subr.mxu0 0.0
          %376 = vmatpush1.msra.mxu0 0.0
          %377 = vmatprep.subr.mxu0 0.0
          %378 = vmatpush1.msra.mxu0 0.0
          %379 = vmatprep.subr.mxu0 0.0
          %380 = vmatpush1.msra.mxu0 0.0
          %381 = vmatprep.subr.mxu0 0.0
          %382 = vmatpush1.msra.mxu0 0.0
          %383 = vmatprep.subr.mxu0 0.0
          %384 = vmatpush1.msra.mxu0 0.0
          %385 = vmatprep.subr.mxu0 0.0
          %386 = vmatpush1.msra.mxu0 0.0
          %387 = vmatprep.subr.mxu0 0.0
          %388 = vmatpush1.msra.mxu0 0.0
          %389 = vmatprep.subr.mxu0 0.0
          %390 = vmatpush1.msra.mxu0 0.0
          %391 = vmatprep.subr.mxu0 0.0
          %392 = vmatpush1.msra.mxu0 0.0
          %393 = vmatprep.subr.mxu0 0.0
          %394 = vmatpush1.msra.mxu0 0.0
          %395 = vmatprep.subr.mxu0 0.0
          %396 = vmatpush1.msra.mxu0 0.0
          %397 = vmatprep.subr.mxu0 0.0
          %398 = vmatpush1.msra.mxu0 0.0
          %399 = vmatprep.subr.mxu0 0.0
          %400 = vmatpush1.msra.mxu0 0.0
          %401 = vmatprep.subr.mxu0 0.0
          %402 = vmatpush1.msra.mxu0 0.0
          %403 = vmatprep.subr.mxu0 0.0
          %404 = vmatpush1.msra.mxu0 0.0
          %405 = vmatprep.subr.mxu0 0.0
          %406 = vmatpush1.msra.mxu0 0.0
          %407 = vmatprep.subr.mxu0 0.0
          %408 = vmatpush1.msra.mxu0 0.0
          %409 = vmatprep.subr.mxu0 0.0
          %410 = vmatpush1.msra.mxu0 0.0
          %411 = vmatprep.subr.mxu0 0.0
          %412 = vmatpush1.msra.mxu0 0.0
          %413 = vmatprep.subr.mxu0 0.0
          %414 = vmatpush1.msra.mxu0 0.0
          %415 = vmatprep.mubr.f32.mxu0 0.0
          %416 = vmatmul.mubr.f32.gmra.mrb[0].mxu0 %v346
          %v417 = vpop.f32.mrb[0].mxu0
          %v418 = vadd.f32 0.0, %v417
          %v419 = vpop.f32.mrb[0].mxu0
          %420 = vdwg.mxu0
          %421 = vst [vmem:[#allocation9] sm:$0x3] %v418
          %vm422 = vcmask 1041408
          %v423 = vsel %vm422, %v418, 0.0
          %v424 = vrot.slane %v423, 4
          %v425 = vadd.f32 %v423, %v424
          %v426 = vrot.slane %v425, 2
          %v427 = vadd.f32 %v425, %v426
          %v428 = vrot.slane %v427, 1
          %v429 = vadd.f32 %v427, %v428
          %v430 = vrcp.pop 2.0
          %v431 = vmul.f32 %v429, %v430
          %v432 = vsub.f32 %v418, %v431
          %v433 = vmul.f32 %v432, %v432
          %v434 = vsel %vm422, %v433, 0.0
          %v435 = vrot.slane %v434, 4
          %v436 = vadd.f32 %v434, %v435
          %v437 = vrot.slane %v436, 2
          %v438 = vadd.f32 %v436, %v437
          %v439 = vrot.slane %v438, 1
          %v440 = vadd.f32 %v438, %v439
          %v441 = vmul.f32 %v440, %v430
          %v442 = vld [vmem:[%s2] sm:$0x1]
          %v443 = vadd.f32 %v441, 1e-05
          %v444 = vrsqrt.pop %v443
          %v445 = vmul.f32 %v442, %v444
          %v447 = vlaneseq
          %v448 = vshrl.u32 %v447, 7
          %v449 = vsub.s32 0, %v448
          %v450 = vrot.slane %v445, %v449
          %v452 = vmul.f32 %v432, %v450
          %v453 = vld [vmem:[%s3] sm:$0x1]
          %v455 = vlaneseq
          %v456 = vshrl.u32 %v455, 7
          %v457 = vsub.s32 0, %v456
          %v458 = vrot.slane %v453, %v457
          %v460 = vadd.f32 %v452, %v458
          %v461 = vpack.c.bf16 %v460, %v460
          %v462 = vld [vmem:[#allocation6] sm:$0xf]
          %v463 = vld [vmem:[#allocation6 + $0x4] sm:$0xf]
          %v464 = vld [vmem:[#allocation6 + $0x8] sm:$0xf]
          %v465 = vld [vmem:[#allocation6 + $0xc] sm:$0xf]
          %v466 = vld [vmem:[#allocation6 + $0x10] sm:$0xf]
          %v467 = vld [vmem:[#allocation6 + $0x14] sm:$0xf]
          %v468 = vld [vmem:[#allocation6 + $0x18] sm:$0xf]
          %v469 = vld [vmem:[#allocation6 + $0x1c] sm:$0xf]
          %v470 = vld [vmem:[#allocation6 + $0x20] sm:$0xf]
          %v471 = vld [vmem:[#allocation6 + $0x24] sm:$0xf]
          %v472 = vld [vmem:[#allocation6 + $0x28] sm:$0xf]
          %v473 = vld [vmem:[#allocation6 + $0x2c] sm:$0xf]
          %v474 = vld [vmem:[#allocation6 + $0x30] sm:$0xf]
          %v475 = vld [vmem:[#allocation6 + $0x34] sm:$0xf]
          %v476 = vld [vmem:[#allocation6 + $0x38] sm:$0xf]
          %v477 = vld [vmem:[#allocation6 + $0x3c] sm:$0xf]
          %v494 = vunpack.c.l.b16 %v462
          %v495 = vunpack.c.l.b16 %v463
          %v496 = vunpack.c.l.b16 %v464
          %v497 = vunpack.c.l.b16 %v465
          %v498 = vunpack.c.l.b16 %v466
          %v499 = vunpack.c.l.b16 %v467
          %v500 = vunpack.c.l.b16 %v468
          %v501 = vunpack.c.l.b16 %v469
          %v502 = vunpack.c.l.b16 %v470
          %v503 = vunpack.c.l.b16 %v471
          %v504 = vunpack.c.l.b16 %v472
          %v505 = vunpack.c.l.b16 %v473
          %v506 = vunpack.c.l.b16 %v474
          %v507 = vunpack.c.l.b16 %v475
          %v508 = vunpack.c.l.b16 %v476
          %v509 = vunpack.c.l.b16 %v477
          %v510 = vpack.c.b16 %v495, %v494
          %v511 = vpack.c.b16 %v497, %v496
          %v512 = vpack.c.b16 %v499, %v498
          %v513 = vpack.c.b16 %v501, %v500
          %v514 = vpack.c.b16 %v503, %v502
          %v515 = vpack.c.b16 %v505, %v504
          %v516 = vpack.c.b16 %v507, %v506
          %v517 = vpack.c.b16 %v509, %v508
          %526 = vmatprep.subr.bf16.mxu0 0
          %527 = vmatpush1.bf16.msra.mxu0 %v510
          %528 = vmatprep.subr.bf16.mxu0 0
          %529 = vmatpush1.bf16.msra.mxu0 %v511
          %530 = vmatprep.subr.bf16.mxu0 0
          %531 = vmatpush1.bf16.msra.mxu0 %v512
          %532 = vmatprep.subr.bf16.mxu0 0
          %533 = vmatpush1.bf16.msra.mxu0 %v513
          %534 = vmatprep.subr.bf16.mxu0 0
          %535 = vmatpush1.bf16.msra.mxu0 %v514
          %536 = vmatprep.subr.bf16.mxu0 0
          %537 = vmatpush1.bf16.msra.mxu0 %v515
          %538 = vmatprep.subr.bf16.mxu0 0
          %539 = vmatpush1.bf16.msra.mxu0 %v516
          %540 = vmatprep.subr.bf16.mxu0 0
          %541 = vmatpush1.bf16.msra.mxu0 %v517
          %542 = vmatprep.subr.bf16.mxu0 0
          %543 = vmatpush1.bf16.msra.mxu0 0
          %544 = vmatprep.subr.bf16.mxu0 0
          %545 = vmatpush1.bf16.msra.mxu0 0
          %546 = vmatprep.subr.bf16.mxu0 0
          %547 = vmatpush1.bf16.msra.mxu0 0
          %548 = vmatprep.subr.bf16.mxu0 0
          %549 = vmatpush1.bf16.msra.mxu0 0
          %550 = vmatprep.subr.bf16.mxu0 0
          %551 = vmatpush1.bf16.msra.mxu0 0
          %552 = vmatprep.subr.bf16.mxu0 0
          %553 = vmatpush1.bf16.msra.mxu0 0
          %554 = vmatprep.subr.bf16.mxu0 0
          %555 = vmatpush1.bf16.msra.mxu0 0
          %556 = vmatprep.subr.bf16.mxu0 0
          %557 = vmatpush1.bf16.msra.mxu0 0
          %558 = vmatprep.mubr.bf16.mxu0 0
          %559 = vmatmul.mubr.bf16.gmra.mrb[0].mxu0 %v461
          %v560 = vpop.f32.mrb[0].mxu0
          %v561 = vadd.f32 0.0, %v560
          %v562 = vpop.f32.mrb[0].mxu0
          %v563 = vpop.f32.mrb[0].mxu0
          %v564 = vpop.f32.mrb[0].mxu0
          %565 = vdwg.mxu0
          %566 = vst [vmem:[#allocation8] sm:$0x3] %v561
        $region56: #{tpu_custom_call.1} parent=39 // pred_fallthru
          _
        // Predicated region
        $region57: #{tpu_custom_call.1} parent=39 // pred_check
          %p567 = pneg %p147
        $region58: #{tpu_custom_call.1} parent=39 // pred_check_branch
          %569 = sbr.rel (%p567) target = $region60
        $region59: #{tpu_custom_call.1} parent=39 // pred_region
          %s571 = ssub.s32 32, 32
          %572 = vsyncadd [#allocation5], %s571
          %s574 = sshll.u32 [#allocation8], 4
          %s575 = int_to_ptr.vmem [resolvable:$true] %s574
          %577 = dma.vmem_to_hbm [thread:$0]  %s575, 32, %s5, [#allocation5]
        $region60: #{tpu_custom_call.1} parent=39 // pred_fallthru
          _
        // Predicated region
        $region61: #{tpu_custom_call.1} parent=39 // pred_check
          %p578 = pneg %p168
        $region62: #{tpu_custom_call.1} parent=39 // pred_check_branch
          %580 = sbr.rel (%p578) target = $region64
        $region63: #{tpu_custom_call.1} parent=39 // pred_region
          %s582 = ssub.s32 32, 32
          %583 = vsyncadd [#allocation10], %s582
          %s585 = sshll.u32 [#allocation9], 4
          %s586 = int_to_ptr.vmem [resolvable:$true] %s585
          %588 = dma.vmem_to_hbm [thread:$0]  %s586, 32, %s6, [#allocation10]
        $region64: #{tpu_custom_call.1} parent=39 // pred_fallthru
          _
        // Predicated region
        $region65: #{tpu_custom_call.1} parent=39 // pred_check
          %p589 = pneg %p147
        $region66: #{tpu_custom_call.1} parent=39 // pred_check_branch
          %591 = sbr.rel (%p589) target = $region68
        $region67: #{tpu_custom_call.1} parent=39 // pred_region
          %592 = dma.done [#allocation5], 32
        $region68: #{tpu_custom_call.1} parent=39 // pred_fallthru
          _
        // Predicated region
        $region69: #{tpu_custom_call.1} parent=39 // pred_check
          %p593 = pneg %p168
        $region70: #{tpu_custom_call.1} parent=39 // pred_check_branch
          %595 = sbr.rel (%p593) target = $region72
        $region71: #{tpu_custom_call.1} parent=39 // pred_region
          %596 = dma.done [#allocation10], 32
        $region72: #{tpu_custom_call.1} parent=39 // pred_fallthru
          _
      $region40: #{tpu_custom_call.1} parent=5 // pred_fallthru
        _
      %p597 = scmp.le.s32.totalorder 2, %s19
      // Predicated region
      $region73: #{tpu_custom_call.1} parent=5 // pred_check
        %p598 = pneg %p597
      $region74: #{tpu_custom_call.1} parent=5 // pred_check_branch
        %600 = sbr.rel (%p598) target = $region76
      $region75: #{tpu_custom_call.1} parent=5 // pred_region
        %s601 = ssub.s32 %s19, 2
      $region76: #{tpu_custom_call.1} parent=5 // pred_fallthru
        _
    $region6: #{tpu_custom_call.1} parent=1 // loop_footer
      %s23 = sadd.s32 1, %s19
    $region7: #{tpu_custom_call.1} parent=1 // loop_footer_branch
      %18 = sbr.rel target = $region3
    $region8: #{tpu_custom_call.1} parent=1 // loop_exit
      _
    %602 = vsyncpa [#allocation4], 1
    %s603 = scalar_lea.sflag [#allocation4], 1
    %604 = vsyncpa %s603, 1
    %605 = vsyncpa [#allocation7], 1
    %606 = vsyncpa [#allocation5], 1
    %s607 = scalar_lea.sflag [#allocation5], 1
    %608 = vsyncpa %s607, 1
    %609 = vsyncpa [#allocation10], 1

</llo_original>
